<compile_context>
chip_gen: v7x
topology: tpu7x:2x2x1
jax: 0.10.0
libtpu: 0.0.40
codegen_flags: <defaults>
</compile_context>

<pallas_src>
import math
from functools import partial

import jax
import jax.numpy as jnp
from jax.experimental import pallas as pl
from jax.experimental.pallas import tpu as pltpu

# ---------------- packed-parameter layout (all lane-padded to 128) ----------
IN_PAD = 128           # padded input-feature dim (MXU contraction dim)
HID_PAD = 128          # padded hidden dim (hidden1)
OUT_PAD = 128          # padded output dim (lane-dense output store)
SUB = 16               # bf16 sublane packing -> batch tiles rounded to 16
_W_ROWS = 2 * HID_PAD  # rows [0,128): w1 (padded); rows [128,256): w23 (padded)


def _round_up(n, m):
    return ((n + m - 1) // m) * m


def _mlp_kernel(x_ref, w_ref, b_ref, o_ref, xs_ref, *, in_size):
    """One batch tile:  o = relu(x @ w1 + b1) @ w23 + b23.

    x_ref : (TB, in_size) bf16  activation tile at natural feature width
    w_ref : (256, 128)    bf16  rows [0,128)=w1, rows [128,256)=w23 (resident)
    b_ref : (8, 128)      f32   row 0 = b1, row 1 = b23 (resident)
    o_ref : (TB, 128)     bf16  lane-dense padded output
    xs_ref: (TB, 128)     bf16  VMEM scratch used to lane-pad x for the MXU
    """
    if in_size < IN_PAD:
        # Lane-pad the activation entirely inside VMEM (no HBM pad round trip).
        # Re-zero every step: the scratch is uninitialized and, under megacore
        # sharding, program_id(0) == 0 may never execute on the second core.
        xs_ref[...] = jnp.zeros(xs_ref.shape, xs_ref.dtype)
        xs_ref[:, :in_size] = x_ref[...]
        x = xs_ref[...]                                   # (TB, 128) bf16
    else:
        x = x_ref[...]

    # Static, tile-aligned slices of the resident packed parameter buffers.
    w1 = w_ref[0:HID_PAD, :]                              # (128,128) bf16
    w23 = w_ref[HID_PAD:_W_ROWS, :]                       # (128,128) bf16
    b1 = b_ref[0:1, :]                                    # (1,128) f32
    b23 = b_ref[1:2, :]                                   # (1,128) f32

    # layer1 + ReLU (bf16 operands -> f32 accumulate; bias/ReLU in f32 on VPU)
    h1 = jnp.dot(x, w1, preferred_element_type=jnp.float32) + b1
    h1 = jnp.maximum(h1, 0.0)

    # fused layer2+layer3 (no nonlinearity between them)
    y = jnp.dot(h1.astype(jnp.bfloat16), w23,
                preferred_element_type=jnp.float32) + b23
    o_ref[...] = y.astype(o_ref.dtype)                    # bf16 writeback


def pack_params(params):
    """Fuse layer2/layer3 and pack parameters into (bf16 weights, f32 biases).

    Call once (outside the hot loop); reuse the packed buffers for every
    forward pass.  Returns (w_packed (256,128) bf16, b_packed (8,128) f32).
    """
    w1, b1 = params["w1"], params["b1"]
    w2, b2 = params["w2"], params["b2"]
    w3, b3 = params["w3"], params["b3"]
    in_size, h1 = w1.shape
    h1b, h2 = w2.shape
    h2b, out_size = w3.shape

    assert h1 == h1b and h2 == h2b, "inconsistent layer dims"
    assert b1.shape == (1, h1) and b2.shape == (1, h2) and b3.shape == (1, out_size), \
        "biases must be shaped (1, fan_out)"
    assert in_size <= IN_PAD and h1 <= HID_PAD and out_size <= OUT_PAD, \
        "dims larger than 128 are not supported by this packed layout"

    # algebraic fusion:  (h @ w2 + b2) @ w3 + b3  ==  h @ (w2@w3) + (b2@w3+b3)
    w23 = w2 @ w3                      # (h1, out), computed in f32
    b23 = b2 @ w3 + b3                 # (1, out)

    wp = jnp.zeros((_W_ROWS, HID_PAD), jnp.float32)
    wp = wp.at[:in_size, :h1].set(w1)
    wp = wp.at[HID_PAD:HID_PAD + h1, :out_size].set(w23)

    bp = jnp.zeros((8, 128), jnp.float32)
    bp = bp.at[0, :h1].set(b1[0])
    bp = bp.at[1, :out_size].set(b23[0])

    return wp.astype(jnp.bfloat16), bp


@partial(jax.jit, static_argnames=("input_size", "output_size", "tb"))
def _pallas_forward(x, w_packed, b_packed, *, input_size, output_size, tb=2048):
    """Pallas path: x (B, input_size) f32 -> (B, output_size) f32."""
    B = x.shape[0]
    tb = max(SUB, _round_up(tb, SUB))

    B_pad = _round_up(B, SUB)
    if B_pad >= 2 * SUB:
        # Ensure >= 2 grid steps so the "parallel" axis shards across both
        # TensorCores on dual-TC chips (v7x megacore).
        TB = min(tb, _round_up(pl.cdiv(B_pad, 2), SUB))
    else:
        TB = B_pad
    B_pad = _round_up(B_pad, TB)

    # Only the batch dim is padded (feature dim stays at its natural width,
    # so this copy is tiny: B_pad * input_size * 2 bytes).
    xb = x.astype(jnp.bfloat16)
    if B_pad != B:
        xb = jnp.pad(xb, ((0, B_pad - B), (0, 0)))

    out_p = pl.pallas_call(
        partial(_mlp_kernel, in_size=input_size),
        out_shape=jax.ShapeDtypeStruct((B_pad, OUT_PAD), jnp.bfloat16),
        grid_spec=pltpu.PrefetchScalarGridSpec(
            num_scalar_prefetch=0,
            grid=(B_pad // TB,),
            in_specs=[
                # activation stream: one batch tile per grid step, natural
                # feature width (legal: last block dim equals full array dim)
                pl.BlockSpec((TB, input_size), lambda i: (i, 0)),
                # packed bf16 weights: same block every step -> VMEM-resident
                # (default double-buffering wastes ~64 KiB; pipeline_mode is
                #  left at default for maximum lowering compatibility)
                pl.BlockSpec((_W_ROWS, HID_PAD), lambda i: (0, 0)),
                # f32 biases: same block every step -> VMEM-resident
                pl.BlockSpec((8, 128), lambda i: (0, 0)),
            ],
            out_specs=pl.BlockSpec((TB, OUT_PAD), lambda i: (i, 0)),
            scratch_shapes=[pltpu.VMEM((TB, IN_PAD), jnp.bfloat16)],
        ),
        compiler_params=pltpu.CompilerParams(
            dimension_semantics=("parallel",),   # megacore sharding on v7x
        ),
    )(xb, w_packed, b_packed)

    return out_p[:B, :output_size].astype(jnp.float32)


@partial(jax.jit, static_argnames=("input_size", "output_size"))
def _xla_forward(x, w_packed, b_packed, *, input_size, output_size):
    """Tiny-batch fast path: identical bf16 math, plain XLA (fused GEMV)."""
    xb = x.astype(jnp.bfloat16)
    h1 = jnp.dot(xb, w_packed[:input_size, :],
                 preferred_element_type=jnp.float32) + b_packed[0:1, :]
    h1 = jnp.maximum(h1, 0.0)
    y = jnp.dot(h1.astype(jnp.bfloat16), w_packed[HID_PAD:, :],
                preferred_element_type=jnp.float32) + b_packed[1:2, :]
    return y[:, :output_size].astype(jnp.float32)


def linear_qnet_forward(x, w_packed, b_packed, *, input_size, output_size,
                        tb=2048, min_pallas_batch=64):
    """Forward pass for Linear_QNet.

    For tiny batches (< min_pallas_batch) the pallas_call fixed overhead plus
    pad/slice wrapper ops dominate, so dispatch to a plain jitted-XLA path
    with identical bf16 math; larger batches use the Pallas kernel.
    """
    if x.shape[0] < min_pallas_batch:
        return _xla_forward(x, w_packed, b_packed,
                            input_size=input_size, output_size=output_size)
    return _pallas_forward(x, w_packed, b_packed,
                           input_size=input_size, output_size=output_size, tb=tb)


def init_params(key, input_size, hidden1, hidden2, output_size):
    """Deterministic init matching nn.Linear's default U(-1/sqrt(fan_in), +)."""
    ks = jax.random.split(key, 6)

    def layer(kw, kb, fan_in, fan_out):
        bound = 1.0 / math.sqrt(fan_in)
        w = jax.random.uniform(kw, (fan_in, fan_out), jnp.float32, -bound, bound)
        b = jax.random.uniform(kb, (1, fan_out), jnp.float32, -bound, bound)
        return w, b

    w1, b1 = layer(ks[0], ks[1], input_size, hidden1)
    w2, b2 = layer(ks[2], ks[3], hidden1, hidden2)
    w3, b3 = layer(ks[4], ks[5], hidden2, output_size)
    return dict(w1=w1, b1=b1, w2=w2, b2=b2, w3=w3, b3=b3)


if __name__ == "__main__":
    # Snake-QNet-style sizes: 11 input features, two hidden layers, 3 actions.
    input_size, hidden1, hidden2, output_size = 11, 32, 32, 3

    key = jax.random.PRNGKey(0)
    kx, kx2, kp = jax.random.split(key, 3)
    params = init_params(kp, input_size, hidden1, hidden2, output_size)
    w_packed, b_packed = pack_params(params)   # one-time packing / layer fusion

    def reference(xv):
        # plain-JAX f32 reference with the original, un-fused math
        h = jnp.maximum(xv @ params["w1"] + params["b1"], 0.0)
        h = h @ params["w2"] + params["b2"]
        return h @ params["w3"] + params["b3"]

    # 1) required small-shape check: batch=2, forced through the Pallas kernel
    x_small = jax.random.normal(kx, (2, input_size), jnp.float32)
    y_small = jax.block_until_ready(
        _pallas_forward(x_small, w_packed, b_packed,
                        input_size=input_size, output_size=output_size))
    assert y_small.shape == (2, output_size)
    assert jnp.allclose(y_small, reference(x_small), atol=4e-2, rtol=4e-2)

    # 2) multi-step grid path (>= 2 parallel steps -> both cores on v7x)
    x_big = jax.random.normal(kx2, (256, input_size), jnp.float32)
    y_big = jax.block_until_ready(
        linear_qnet_forward(x_big, w_packed, b_packed,
                            input_size=input_size, output_size=output_size))
    assert y_big.shape == (256, output_size)
    assert jnp.allclose(y_big, reference(x_big), atol=4e-2, rtol=4e-2)

    # 3) tiny-batch fast path (plain XLA dispatch for the real online case)
    y_fast = jax.block_until_ready(
        linear_qnet_forward(x_small, w_packed, b_packed,
                            input_size=input_size, output_size=output_size))
    assert jnp.allclose(y_fast, reference(x_small), atol=4e-2, rtol=4e-2)

    print("KERNEL_OK")
</pallas_src>

<mosaic_0001>
module attributes {stable_mosaic.version = 11 : i64} {
  func.func @_mlp_kernel(%arg0: i32, %arg1: memref<16x11xbf16, #tpu.memory_space<vmem>>, %arg2: memref<256x128xbf16, #tpu.memory_space<vmem>>, %arg3: memref<8x128xf32, #tpu.memory_space<vmem>>, %arg4: memref<16x128xbf16, #tpu.memory_space<vmem>>, %arg5: memref<16x128xbf16, #tpu.memory_space<vmem>>) attributes {dimension_semantics = [#tpu.dimension_semantics<parallel>], iteration_bounds = array<i64: 1>, scalar_prefetch = 0 : i64, scratch_operands = 1 : i64, tpu.core_type = #tpu.core_type<tc>, window_params = [{transform_indices = @transform_0, window_bounds = array<i64: 16, 11>}, {pipeline_mode = #tpu.pipeline_mode<synchronous>, transform_indices = @transform_1, window_bounds = array<i64: 256, 128>}, {pipeline_mode = #tpu.pipeline_mode<synchronous>, transform_indices = @transform_2, window_bounds = array<i64: 8, 128>}, {transform_indices = @transform_3, window_bounds = array<i64: 16, 128>}]} {
    %cst = arith.constant 0.000000e+00 : bf16
    %0 = vector.broadcast %cst : bf16 to vector<16x128xbf16>
    %c0 = arith.constant 0 : index
    %c0_0 = arith.constant 0 : index
    %1 = vector.load %arg5[%c0, %c0_0] : memref<16x128xbf16, #tpu.memory_space<vmem>>, vector<16x128xbf16>
    tpu.vector_store %arg5[%c0, %c0_0], %0 {strides = array<i32>} : memref<16x128xbf16, #tpu.memory_space<vmem>>, vector<16x128xbf16>,
    %c0_1 = arith.constant 0 : index
    %c0_2 = arith.constant 0 : index
    %2 = vector.load %arg1[%c0_1, %c0_2] : memref<16x11xbf16, #tpu.memory_space<vmem>>, vector<16x11xbf16>
    %c0_3 = arith.constant 0 : index
    %c0_4 = arith.constant 0 : index
    %3 = vector.load %arg5[%c0_3, %c0_4] : memref<16x128xbf16, #tpu.memory_space<vmem>>, vector<16x11xbf16>
    tpu.vector_store %arg5[%c0_3, %c0_4], %2 {strides = array<i32>} : memref<16x128xbf16, #tpu.memory_space<vmem>>, vector<16x11xbf16>,
    %c0_5 = arith.constant 0 : index
    %c0_6 = arith.constant 0 : index
    %4 = vector.load %arg5[%c0_5, %c0_6] : memref<16x128xbf16, #tpu.memory_space<vmem>>, vector<16x128xbf16>
    %c0_7 = arith.constant 0 : index
    %c0_8 = arith.constant 0 : index
    %5 = vector.load %arg2[%c0_7, %c0_8] : memref<256x128xbf16, #tpu.memory_space<vmem>>, vector<128x128xbf16>
    %c128 = arith.constant 128 : index
    %c0_9 = arith.constant 0 : index
    %6 = vector.load %arg2[%c128, %c0_9] : memref<256x128xbf16, #tpu.memory_space<vmem>>, vector<128x128xbf16>
    %c0_10 = arith.constant 0 : index
    %c0_11 = arith.constant 0 : index
    %7 = vector.load %arg3[%c0_10, %c0_11] : memref<8x128xf32, #tpu.memory_space<vmem>>, vector<1x128xf32>
    %c1 = arith.constant 1 : index
    %c0_12 = arith.constant 0 : index
    %8 = vector.load %arg3[%c1, %c0_12] : memref<8x128xf32, #tpu.memory_space<vmem>>, vector<1x128xf32>
    %cst_13 = arith.constant dense<0.000000e+00> : vector<16x128xf32>
    %9 = tpu.matmul %4, %5, %cst_13 {dimension_numbers = #tpu.dot_dimension_numbers<[1], [0], [0], [1], [0, 0, 1, 1], [], []>} : vector<16x128xbf16>, vector<128x128xbf16>, vector<16x128xf32> -> vector<16x128xf32>
    %10 = vector.broadcast %7 : vector<1x128xf32> to vector<16x128xf32>
    %11 = arith.addf %9, %10 : vector<16x128xf32>
    %cst_14 = arith.constant 0.000000e+00 : f32
    %12 = vector.broadcast %cst_14 : f32 to vector<16x128xf32>
    %13 = arith.maximumf %11, %12 : vector<16x128xf32>
    %14 = arith.truncf %13 : vector<16x128xf32> to vector<16x128xbf16>
    %cst_15 = arith.constant dense<0.000000e+00> : vector<16x128xf32>
    %15 = tpu.matmul %14, %6, %cst_15 {dimension_numbers = #tpu.dot_dimension_numbers<[1], [0], [0], [1], [0, 0, 1, 1], [], []>} : vector<16x128xbf16>, vector<128x128xbf16>, vector<16x128xf32> -> vector<16x128xf32>
    %16 = vector.broadcast %8 : vector<1x128xf32> to vector<16x128xf32>
    %17 = arith.addf %15, %16 : vector<16x128xf32>
    %18 = arith.truncf %17 : vector<16x128xf32> to vector<16x128xbf16>
    %c0_16 = arith.constant 0 : index
    %c0_17 = arith.constant 0 : index
    %19 = vector.load %arg4[%c0_16, %c0_17] : memref<16x128xbf16, #tpu.memory_space<vmem>>, vector<16x128xbf16>
    tpu.vector_store %arg4[%c0_16, %c0_17], %18 {strides = array<i32>} : memref<16x128xbf16, #tpu.memory_space<vmem>>, vector<16x128xbf16>,
    return
  }
  func.func @transform_0(%arg0: i32) -> (i32, i32) {
    %c0_i32 = arith.constant 0 : i32
    %c0_i32_0 = arith.constant 0 : i32
    return %arg0, %c0_i32 : i32, i32
  }
  func.func @transform_1(%arg0: i32) -> (i32, i32) {
    %c0_i32 = arith.constant 0 : i32
    %c0_i32_0 = arith.constant 0 : i32
    %c0_i32_1 = arith.constant 0 : i32
    return %c0_i32, %c0_i32_0 : i32, i32
  }
  func.func @transform_2(%arg0: i32) -> (i32, i32) {
    %c0_i32 = arith.constant 0 : i32
    %c0_i32_0 = arith.constant 0 : i32
    %c0_i32_1 = arith.constant 0 : i32
    return %c0_i32, %c0_i32_0 : i32, i32
  }
  func.func @transform_3(%arg0: i32) -> (i32, i32) {
    %c0_i32 = arith.constant 0 : i32
    %c0_i32_0 = arith.constant 0 : i32
    return %arg0, %c0_i32 : i32, i32
  }
}

</mosaic_0001>

<llo_original>
// kernel: _pallas_forward.1
$region0: #{_pallas_forward.1}
  #allocation0 [shape = 'u32[]', space=smem, size = 0x4, offset = 0x4, fixed_abs, tag = 'smem constant byte address 0x4 - core index']
  #allocation1 [shape = 'u32[144,128]{1,0:T(1,128)}', space=vmem, size = 0x12000, scoped, tag = 'internal scratch']
  #allocation2 [shape = 'bf16[16,128]{1,0:T(16,128)(2,1)}', space=vmem, size = 0x1000, scoped, tag = 'scratch operand']
  %s0 = inlined_call_operand.vmem [shape: bf16[16,11], index: 0, kind: input, shape index: {}]
  %s1 = inlined_call_operand.hbm [shape: bf16[256,128], index: 1, kind: input, shape index: {}]
  %s2 = inlined_call_operand.vmem [shape: f32[8,128], index: 2, kind: input, shape index: {}]
  %s3 = inlined_call_operand.vmem [shape: bf16[16,128], index: 3, kind: output, shape index: {}]
  %s4 = sld [smem:[#allocation0]]
  $region26: #{_pallas_forward.1} parent=0
    _
  %s6 = ssub.s32 1, %s4
  %s7 = scalar_select 0, %s6, %s4
  $region1: #{_pallas_forward.1} parent=0
    #allocation3 [shape = 'u8[65536]{0}', space=vmem, size = 0x10000, scoped, tag = 'input window, operand 1, single buffered']
    #allocation4 [shape = 's32[1]{0}', space=sflag, size = 0x4, scoped, tag = 'scoped memory for _pallas_forward.1']
    %8 = vsyncpa [#allocation4], 0
    // Predicated region
    $region2: #{_pallas_forward.1} parent=1 // pred_check
      _
    $region3: #{_pallas_forward.1} parent=1 // pred_check_branch
      %10 = sbr.rel (0) target = $region5
    $region4: #{_pallas_forward.1} parent=1 // pred_region
      _
    $region5: #{_pallas_forward.1} parent=1 // pred_fallthru
      _
    // Predicated region
    $region6: #{_pallas_forward.1} parent=1 // pred_check
      _
    $region7: #{_pallas_forward.1} parent=1 // pred_check_branch
      %12 = sbr.rel (0) target = $region9
    $region8: #{_pallas_forward.1} parent=1 // pred_region
      %s14 = ssub.s32 2048, 2048
      %15 = vsyncadd [#allocation4], %s14
      %s16 = sshll.u32 [#allocation3], 4
      %s17 = int_to_ptr.vmem [resolvable:$true] %s16
      %22 = dma.hbm_to_vmem [thread:$0]  %s1, 2048, %s17, [#allocation4], 64, 64, 4
    $region9: #{_pallas_forward.1} parent=1 // pred_fallthru
      _
    // Predicated region
    $region10: #{_pallas_forward.1} parent=1 // pred_check
      _
    $region11: #{_pallas_forward.1} parent=1 // pred_check_branch
      %24 = sbr.rel (0) target = $region13
    $region12: #{_pallas_forward.1} parent=1 // pred_region
      _
    $region13: #{_pallas_forward.1} parent=1 // pred_fallthru
      _
    // Predicated region
    $region14: #{_pallas_forward.1} parent=1 // pred_check
      _
    $region15: #{_pallas_forward.1} parent=1 // pred_check_branch
      %26 = sbr.rel (0) target = $region17
    $region16: #{_pallas_forward.1} parent=1 // pred_region
      %27 = dma.done [#allocation4], 2048
    $region17: #{_pallas_forward.1} parent=1 // pred_fallthru
      _
    %29 = vst [vmem:[#allocation2] sm:$0xff] 0
    %v30 = vld [vmem:[%s0] sm:$0xf]
    %v31 = vld [vmem:[%s0 + $0x4] sm:$0xf]
    %v34 = vunpack.c.l.b16 %v30
    %v35 = vunpack.c.l.b16 %v31
    %v36 = vpack.c.b16 %v35, %v34
    %vm38 = vcmask 89088
    %39 = vst.msk [vmem:[#allocation2] sm:$0xff] %vm38, %v36
    %v40 = vld [vmem:[#allocation2] sm:$0xff]
    %v41 = vld [vmem:[#allocation3] sm:$0xf]
    %v42 = vld [vmem:[#allocation3 + $0x4] sm:$0xf]
    %v43 = vld [vmem:[#allocation3 + $0x8] sm:$0xf]
    %v44 = vld [vmem:[#allocation3 + $0xc] sm:$0xf]
    %v45 = vld [vmem:[#allocation3 + $0x10] sm:$0xf]
    %v46 = vld [vmem:[#allocation3 + $0x14] sm:$0xf]
    %v47 = vld [vmem:[#allocation3 + $0x18] sm:$0xf]
    %v48 = vld [vmem:[#allocation3 + $0x1c] sm:$0xf]
    %v49 = vld [vmem:[#allocation3 + $0x20] sm:$0xf]
    %v50 = vld [vmem:[#allocation3 + $0x24] sm:$0xf]
    %v51 = vld [vmem:[#allocation3 + $0x28] sm:$0xf]
    %v52 = vld [vmem:[#allocation3 + $0x2c] sm:$0xf]
    %v53 = vld [vmem:[#allocation3 + $0x30] sm:$0xf]
    %v54 = vld [vmem:[#allocation3 + $0x34] sm:$0xf]
    %v55 = vld [vmem:[#allocation3 + $0x38] sm:$0xf]
    %v56 = vld [vmem:[#allocation3 + $0x3c] sm:$0xf]
    %v57 = vld [vmem:[#allocation3 + $0x40] sm:$0xf]
    %v58 = vld [vmem:[#allocation3 + $0x44] sm:$0xf]
    %v59 = vld [vmem:[#allocation3 + $0x48] sm:$0xf]
    %v60 = vld [vmem:[#allocation3 + $0x4c] sm:$0xf]
    %v61 = vld [vmem:[#allocation3 + $0x50] sm:$0xf]
    %v62 = vld [vmem:[#allocation3 + $0x54] sm:$0xf]
    %v63 = vld [vmem:[#allocation3 + $0x58] sm:$0xf]
    %v64 = vld [vmem:[#allocation3 + $0x5c] sm:$0xf]
    %v65 = vld [vmem:[#allocation3 + $0x60] sm:$0xf]
    %v66 = vld [vmem:[#allocation3 + $0x64] sm:$0xf]
    %v67 = vld [vmem:[#allocation3 + $0x68] sm:$0xf]
    %v68 = vld [vmem:[#allocation3 + $0x6c] sm:$0xf]
    %v69 = vld [vmem:[#allocation3 + $0x70] sm:$0xf]
    %v70 = vld [vmem:[#allocation3 + $0x74] sm:$0xf]
    %v71 = vld [vmem:[#allocation3 + $0x78] sm:$0xf]
    %v72 = vld [vmem:[#allocation3 + $0x7c] sm:$0xf]
    %v73 = vld [vmem:[%s2] sm:$0x1]
    %v74 = vld [vmem:[%s2 + $0x1] sm:$0x1]
    %v75 = vlaneseq
    %v76 = vshrl.u32 %v75, 7
    %v77 = vsub.s32 0, %v76
    %v78 = vrot.slane %v73, %v77
    %v95 = vunpack.c.l.b16 %v41
    %v96 = vunpack.c.l.b16 %v42
    %v97 = vunpack.c.l.b16 %v43
    %v98 = vunpack.c.l.b16 %v44
    %v99 = vunpack.c.l.b16 %v45
    %v100 = vunpack.c.l.b16 %v46
    %v101 = vunpack.c.l.b16 %v47
    %v102 = vunpack.c.l.b16 %v48
    %v103 = vunpack.c.l.b16 %v49
    %v104 = vunpack.c.l.b16 %v50
    %v105 = vunpack.c.l.b16 %v51
    %v106 = vunpack.c.l.b16 %v52
    %v107 = vunpack.c.l.b16 %v53
    %v108 = vunpack.c.l.b16 %v54
    %v109 = vunpack.c.l.b16 %v55
    %v110 = vunpack.c.l.b16 %v56
    %v111 = vpack.c.b16 %v96, %v95
    %v112 = vpack.c.b16 %v98, %v97
    %v113 = vpack.c.b16 %v100, %v99
    %v114 = vpack.c.b16 %v102, %v101
    %v115 = vpack.c.b16 %v104, %v103
    %v116 = vpack.c.b16 %v106, %v105
    %v117 = vpack.c.b16 %v108, %v107
    %v118 = vpack.c.b16 %v110, %v109
    %127 = vmatprep.subr.bf16.mxu0 0
    %128 = vmatpush1.bf16.msra.mxu0 %v111
    %129 = vmatprep.subr.bf16.mxu0 0
    %130 = vmatpush1.bf16.msra.mxu0 %v112
    %131 = vmatprep.subr.bf16.mxu0 0
    %132 = vmatpush1.bf16.msra.mxu0 %v113
    %133 = vmatprep.subr.bf16.mxu0 0
    %134 = vmatpush1.bf16.msra.mxu0 %v114
    %135 = vmatprep.subr.bf16.mxu0 0
    %136 = vmatpush1.bf16.msra.mxu0 %v115
    %137 = vmatprep.subr.bf16.mxu0 0
    %138 = vmatpush1.bf16.msra.mxu0 %v116
    %139 = vmatprep.subr.bf16.mxu0 0
    %140 = vmatpush1.bf16.msra.mxu0 %v117
    %141 = vmatprep.subr.bf16.mxu0 0
    %142 = vmatpush1.bf16.msra.mxu0 %v118
    %143 = vmatprep.subr.bf16.mxu0 0
    %144 = vmatpush1.bf16.msra.mxu0 0
    %145 = vmatprep.subr.bf16.mxu0 0
    %146 = vmatpush1.bf16.msra.mxu0 0
    %147 = vmatprep.subr.bf16.mxu0 0
    %148 = vmatpush1.bf16.msra.mxu0 0
    %149 = vmatprep.subr.bf16.mxu0 0
    %150 = vmatpush1.bf16.msra.mxu0 0
    %151 = vmatprep.subr.bf16.mxu0 0
    %152 = vmatpush1.bf16.msra.mxu0 0
    %153 = vmatprep.subr.bf16.mxu0 0
    %154 = vmatpush1.bf16.msra.mxu0 0
    %155 = vmatprep.subr.bf16.mxu0 0
    %156 = vmatpush1.bf16.msra.mxu0 0
    %157 = vmatprep.subr.bf16.mxu0 0
    %158 = vmatpush1.bf16.msra.mxu0 0
    %159 = vmatprep.mubr.bf16.mxu0 0
    %160 = vmatmul.mubr.bf16.gmra.mrb[0].mxu0 %v40
    %v161 = vpop.f32.mrb[0].mxu0
    %v162 = vadd.f32 %v78, %v161
    %v163 = vpop.f32.mrb[0].mxu0
    %v164 = vpop.f32.mrb[0].mxu0
    %v165 = vadd.f32 %v78, %v164
    %v166 = vpop.f32.mrb[0].mxu0
    %167 = vdwg.mxu0
    %v168 = vmax.f32 %v162, 0.0
    %v169 = vmax.f32 %v165, 0.0
    %v170 = vpack.c.bf16 %v169, %v168
    %v171 = vlaneseq
    %v172 = vshrl.u32 %v171, 7
    %v173 = vsub.s32 0, %v172
    %v174 = vrot.slane %v74, %v173
    %v191 = vunpack.c.l.b16 %v57
    %v192 = vunpack.c.l.b16 %v58
    %v193 = vunpack.c.l.b16 %v59
    %v194 = vunpack.c.l.b16 %v60
    %v195 = vunpack.c.l.b16 %v61
    %v196 = vunpack.c.l.b16 %v62
    %v197 = vunpack.c.l.b16 %v63
    %v198 = vunpack.c.l.b16 %v64
    %v199 = vunpack.c.l.b16 %v65
    %v200 = vunpack.c.l.b16 %v66
    %v201 = vunpack.c.l.b16 %v67
    %v202 = vunpack.c.l.b16 %v68
    %v203 = vunpack.c.l.b16 %v69
    %v204 = vunpack.c.l.b16 %v70
    %v205 = vunpack.c.l.b16 %v71
    %v206 = vunpack.c.l.b16 %v72
    %v207 = vpack.c.b16 %v192, %v191
    %v208 = vpack.c.b16 %v194, %v193
    %v209 = vpack.c.b16 %v196, %v195
    %v210 = vpack.c.b16 %v198, %v197
    %v211 = vpack.c.b16 %v200, %v199
    %v212 = vpack.c.b16 %v202, %v201
    %v213 = vpack.c.b16 %v204, %v203
    %v214 = vpack.c.b16 %v206, %v205
    %223 = vmatprep.subr.bf16.mxu0 0
    %224 = vmatpush1.bf16.msra.mxu0 %v207
    %225 = vmatprep.subr.bf16.mxu0 0
    %226 = vmatpush1.bf16.msra.mxu0 %v208
    %227 = vmatprep.subr.bf16.mxu0 0
    %228 = vmatpush1.bf16.msra.mxu0 %v209
    %229 = vmatprep.subr.bf16.mxu0 0
    %230 = vmatpush1.bf16.msra.mxu0 %v210
    %231 = vmatprep.subr.bf16.mxu0 0
    %232 = vmatpush1.bf16.msra.mxu0 %v211
    %233 = vmatprep.subr.bf16.mxu0 0
    %234 = vmatpush1.bf16.msra.mxu0 %v212
    %235 = vmatprep.subr.bf16.mxu0 0
    %236 = vmatpush1.bf16.msra.mxu0 %v213
    %237 = vmatprep.subr.bf16.mxu0 0
    %238 = vmatpush1.bf16.msra.mxu0 %v214
    %239 = vmatprep.subr.bf16.mxu0 0
    %240 = vmatpush1.bf16.msra.mxu0 0
    %241 = vmatprep.subr.bf16.mxu0 0
    %242 = vmatpush1.bf16.msra.mxu0 0
    %243 = vmatprep.subr.bf16.mxu0 0
    %244 = vmatpush1.bf16.msra.mxu0 0
    %245 = vmatprep.subr.bf16.mxu0 0
    %246 = vmatpush1.bf16.msra.mxu0 0
    %247 = vmatprep.subr.bf16.mxu0 0
    %248 = vmatpush1.bf16.msra.mxu0 0
    %249 = vmatprep.subr.bf16.mxu0 0
    %250 = vmatpush1.bf16.msra.mxu0 0
    %251 = vmatprep.subr.bf16.mxu0 0
    %252 = vmatpush1.bf16.msra.mxu0 0
    %253 = vmatprep.subr.bf16.mxu0 0
    %254 = vmatpush1.bf16.msra.mxu0 0
    %255 = vmatprep.mubr.bf16.mxu0 0
    %256 = vmatmul.mubr.bf16.gmra.mrb[0].mxu0 %v170
    %v257 = vpop.f32.mrb[0].mxu0
    %v258 = vadd.f32 %v174, %v257
    %v259 = vpop.f32.mrb[0].mxu0
    %v260 = vpop.f32.mrb[0].mxu0
    %v261 = vadd.f32 %v174, %v260
    %v262 = vpop.f32.mrb[0].mxu0
    %263 = vdwg.mxu0
    %v264 = vpack.c.bf16 %v261, %v258
    %v266 = vunpack.c.l.b16 %v264
    %v267 = vunpack.c.h.b16 %v264
    %v268 = vpack.c.b16 %v266, %v266
    %v269 = vpack.c.b16 %v267, %v267
    %272 = vst [vmem:[%s3] sm:$0xf] %v268
    %273 = vst [vmem:[%s3 + $0x4] sm:$0xf] %v269
    // Predicated region
    $region18: #{_pallas_forward.1} parent=1 // pred_check
      _
    $region19: #{_pallas_forward.1} parent=1 // pred_check_branch
      %275 = sbr.rel (0) target = $region21
    $region20: #{_pallas_forward.1} parent=1 // pred_region
      _
    $region21: #{_pallas_forward.1} parent=1 // pred_fallthru
      _
    // Predicated region
    $region22: #{_pallas_forward.1} parent=1 // pred_check
      _
    $region23: #{_pallas_forward.1} parent=1 // pred_check_branch
      %277 = sbr.rel (0) target = $region25
    $region24: #{_pallas_forward.1} parent=1 // pred_region
      _
    $region25: #{_pallas_forward.1} parent=1 // pred_fallthru
      _
    %278 = vsyncpa [#allocation4], 1

</llo_original>
